<compile_context>
chip_gen: v5e
topology: v5e:2x2
jax: 0.10.0
libtpu: 0.0.40
codegen_flags: <defaults>
</compile_context>

<pallas_src>
import functools

import jax
import jax.numpy as jnp
from jax.experimental import pallas as pl
from jax.experimental.pallas import tpu as pltpu


def _banded_conv_weights(w_hwio, width):
    """(KH, KW, Cin, Cout) 'SAME' conv kernel -> (KH, width*Cin, width*Cout)
    banded block matrices B such that, with rows laid out lane-dense as
    (..., width*Cin),

        out_rows[h] = sum_kh  in_rows[h + kh - KH//2] @ B[kh]

    reproduces the 2-D convolution.  Horizontal zero padding is encoded in the
    band structure (missing taps simply are not present), so the kernel never
    needs a W halo or any lane shuffling."""
    kh_, kw_, cin, cout = w_hwio.shape
    b = jnp.zeros((kh_, width * cin, width * cout), w_hwio.dtype)
    for kw in range(kw_):
        for wp in range(width):          # output column
            w_in = wp + kw - kw_ // 2    # contributing input column
            if 0 <= w_in < width:
                b = b.at[:, w_in * cin:(w_in + 1) * cin,
                         wp * cout:(wp + 1) * cout].set(w_hwio[:, kw])
    return b


def _fused_double_conv_kernel(xp_ref, w1_ref, b1_ref, w2_ref, b2_ref,
                              o1_ref, o2_ref, h1p_ref, *, bt, H, W, C1, C2):
    """Per grid step: `bt` images, conv1 (3x3 SAME) -> relu -> conv2 (3x3 SAME).

    xp_ref : (bt, H+2, W*Cin)   row-padded lane-dense input        (f32)
    w1_ref : (3, W*Cin, W*C1)   banded conv1 weights               (bf16)
    b1_ref : (1, W*C1)          conv1 bias tiled over W            (f32)
    w2_ref : (3, W*C1, W*C2)    banded conv2 weights               (bf16)
    b2_ref : (1, W*C2)          conv2 bias tiled over W            (f32)
    o1_ref : (bt, H, W*C1)      conv1 hook output (pre-relu), lane-dense
    o2_ref : (bt, H, W*C2)      conv2 hook output (pre-relu), lane-dense
    h1p_ref: VMEM scratch (bt, H+2, W*C1) row-padded relu(h1)      (f32)
    """
    cin = xp_ref.shape[-1] // W

    # Zero ONLY the 2-row vertical halo of the scratch.  Done every step (two
    # full-lane vector stores, negligible) rather than once under
    # program_id==0, so it stays correct when the "parallel" batch axis is
    # split across v7x's two TensorCores (each core owns its own scratch).
    h1p_ref[:, 0:1, :] = jnp.zeros((bt, 1, W * C1), h1p_ref.dtype)
    h1p_ref[:, H + 1:H + 2, :] = jnp.zeros((bt, 1, W * C1), h1p_ref.dtype)

    # ---- conv1: 3 lane-dense bf16 matmuls (one per kernel row) ----
    acc1 = jnp.zeros((bt * H, W * C1), jnp.float32)
    for kh in range(3):
        lhs = xp_ref[:, kh:kh + H, :].reshape(bt * H, W * cin).astype(jnp.bfloat16)
        acc1 += jnp.dot(lhs, w1_ref[kh], preferred_element_type=jnp.float32)
    h1 = acc1 + b1_ref[...]                                    # (bt*H, W*C1) f32

    # conv1 hook output (pre-activation), lane-dense unmasked store.
    o1_ref[...] = h1.reshape(bt, H, W * C1).astype(o1_ref.dtype)

    # ReLU applied exactly once, into the interior rows of the padded scratch.
    h1p_ref[:, 1:H + 1, :] = jnp.maximum(h1, 0.0).reshape(bt, H, W * C1)

    # ---- conv2: 3 lane-dense bf16 matmuls over the relu'd rows ----
    acc2 = jnp.zeros((bt * H, W * C2), jnp.float32)
    for kh in range(3):
        lhs = h1p_ref[:, kh:kh + H, :].reshape(bt * H, W * C1).astype(jnp.bfloat16)
        acc2 += jnp.dot(lhs, w2_ref[kh], preferred_element_type=jnp.float32)
    h2 = acc2 + b2_ref[...]

    o2_ref[...] = h2.reshape(bt, H, W * C2).astype(o2_ref.dtype)


def _pick_batch_tile(n, requested):
    """Batch tile that divides n and keeps >=2 grid steps (v7x has 2 TCs)."""
    bt = max(1, min(requested, n // 2 if n >= 2 else n))
    while n % bt:
        bt -= 1
    return bt


def fused_double_conv(x_nhwc, w1_hwio, b1, w2_hwio, b2, *, batch_tile=8):
    """conv1 / relu / conv2 (both 3x3, stride 1, 'SAME') in one pallas_call.

    Returns the two pre-activation conv outputs in lane-dense form:
    (N, H, W*C1) and (N, H, W*C2).
    """
    # TODO(synk): for realistic (large H*W*C) images an H-tiling grid axis with
    # a 2-row halo is needed; budget tiles against ~24-28 MiB for v7x's 64 MiB
    # VMEM and set vmem_limit_bytes explicitly.  At demo sizes per-image blocks
    # are optimal.
    N, H, W, Cin = x_nhwc.shape
    C1 = w1_hwio.shape[-1]
    C2 = w2_hwio.shape[-1]
    bt = _pick_batch_tile(N, batch_tile)

    # Lane-dense input rows (w and c merged into the lane dim) with a 1-row
    # vertical halo only; horizontal padding lives inside the banded weights.
    xp = jnp.pad(x_nhwc.reshape(N, H, W * Cin), ((0, 0), (1, 1), (0, 0)))

    # Banded block weights (built once, bf16 for the MXU) + lane-tiled biases.
    w1b = _banded_conv_weights(w1_hwio, W).astype(jnp.bfloat16)
    w2b = _banded_conv_weights(w2_hwio, W).astype(jnp.bfloat16)
    b1l = jnp.tile(b1, W).reshape(1, W * C1).astype(jnp.float32)
    b2l = jnp.tile(b2, W).reshape(1, W * C2).astype(jnp.float32)

    kernel = functools.partial(_fused_double_conv_kernel,
                               bt=bt, H=H, W=W, C1=C1, C2=C2)

    o1, o2 = pl.pallas_call(
        kernel,
        out_shape=(jax.ShapeDtypeStruct((N, H, W * C1), x_nhwc.dtype),
                   jax.ShapeDtypeStruct((N, H, W * C2), x_nhwc.dtype)),
        grid=(N // bt,),
        in_specs=[
            pl.BlockSpec((bt, H + 2, W * Cin), lambda n: (n, 0, 0)),
            pl.BlockSpec((3, W * Cin, W * C1), lambda n: (0, 0, 0)),
            pl.BlockSpec((1, W * C1), lambda n: (0, 0)),
            pl.BlockSpec((3, W * C1, W * C2), lambda n: (0, 0, 0)),
            pl.BlockSpec((1, W * C2), lambda n: (0, 0)),
        ],
        out_specs=(pl.BlockSpec((bt, H, W * C1), lambda n: (n, 0, 0)),
                   pl.BlockSpec((bt, H, W * C2), lambda n: (n, 0, 0))),
        scratch_shapes=[pltpu.VMEM((bt, H + 2, W * C1), jnp.float32)],
        compiler_params=pltpu.CompilerParams(
            dimension_semantics=("parallel",)),
    )(xp, w1b, b1l, w2b, b2l)
    return o1, o2


def init_params(key, cin=4, c1=8, c2=16):
    """Deterministic synthetic parameters for the wrapped model (HWIO weights)."""
    k1, k2, k3, k4 = jax.random.split(key, 4)
    return {
        "w1": 0.1 * jax.random.normal(k1, (3, 3, cin, c1), jnp.float32),
        "b1": 0.1 * jax.random.normal(k2, (c1,), jnp.float32),
        "w2": 0.1 * jax.random.normal(k3, (3, 3, c1, c2), jnp.float32),
        "b2": 0.1 * jax.random.normal(k4, (c2,), jnp.float32),
    }


def embeddings_extractor_forward(params, x_nchw, layers=("conv1", "conv2")):
    """JAX/Pallas equivalent of EmbeddingsExtractor.forward.

    Runs the wrapped model and returns {layer_id: hook_output}, where the hook
    outputs are the raw Conv2d module outputs (pre-ReLU), in NCHW like PyTorch.
    """
    # TODO(synk): dynamic register_forward_hook on arbitrary nn.Module names has
    # no Pallas equivalent; intermediates are returned explicitly instead.
    x = jnp.transpose(x_nchw, (0, 2, 3, 1))  # NCHW -> NHWC
    N, H, W, _ = x.shape
    C1 = params["w1"].shape[-1]
    C2 = params["w2"].shape[-1]

    h1, h2 = fused_double_conv(x, params["w1"], params["b1"],
                               params["w2"], params["b2"])

    # NOTE: if downstream code accepts NHWC / lane-dense (N, H, W*C) features,
    # return h1/h2 directly and skip these relayouts; NCHW kept for PyTorch parity.
    features = {
        "conv1": jnp.transpose(h1.reshape(N, H, W, C1), (0, 3, 1, 2)),
        "conv2": jnp.transpose(h2.reshape(N, H, W, C2), (0, 3, 1, 2)),
    }
    return {k: v for k, v in features.items() if k in layers}


def _reference_features(params, x_nchw):
    """Pure-JAX reference (lax.conv, f32) for correctness checking."""
    x = jnp.transpose(x_nchw, (0, 2, 3, 1))
    dn = jax.lax.conv_dimension_numbers(x.shape, params["w1"].shape,
                                        ("NHWC", "HWIO", "NHWC"))
    h1 = jax.lax.conv_general_dilated(x, params["w1"], (1, 1), "SAME",
                                      dimension_numbers=dn) + params["b1"]
    dn2 = jax.lax.conv_dimension_numbers(h1.shape, params["w2"].shape,
                                         ("NHWC", "HWIO", "NHWC"))
    h2 = jax.lax.conv_general_dilated(jnp.maximum(h1, 0.0), params["w2"], (1, 1),
                                      "SAME", dimension_numbers=dn2) + params["b2"]
    return {"conv1": jnp.transpose(h1, (0, 3, 1, 2)),
            "conv2": jnp.transpose(h2, (0, 3, 1, 2))}


if __name__ == "__main__":
    key = jax.random.PRNGKey(0)
    kp, kx = jax.random.split(key)
    params = init_params(kp, cin=4, c1=8, c2=16)

    # small input consistent with the module's forward: image batch (NCHW)
    x = jax.random.normal(kx, (2, 4, 16, 16), jnp.float32)

    feats = jax.block_until_ready(embeddings_extractor_forward(params, x))

    assert feats["conv1"].shape == (2, 8, 16, 16)
    assert feats["conv2"].shape == (2, 16, 16, 16)

    ref = _reference_features(params, x)
    for name in ("conv1", "conv2"):
        # bf16 MXU operands with f32 accumulation -> slightly relaxed tolerance.
        assert jnp.allclose(feats[name], ref[name], atol=2e-2, rtol=1e-2), name

    print("KERNEL_OK")
</pallas_src>

<mosaic_0001>
module attributes {stable_mosaic.version = 11 : i64} {
  func.func @_fused_double_conv_kernel(%arg0: i32, %arg1: memref<1x18x64xf32, #tpu.memory_space<vmem>>, %arg2: memref<3x64x128xbf16, #tpu.memory_space<vmem>>, %arg3: memref<1x128xf32, #tpu.memory_space<vmem>>, %arg4: memref<3x128x256xbf16, #tpu.memory_space<vmem>>, %arg5: memref<1x256xf32, #tpu.memory_space<vmem>>, %arg6: memref<1x16x128xf32, #tpu.memory_space<vmem>>, %arg7: memref<1x16x256xf32, #tpu.memory_space<vmem>>, %arg8: memref<1x18x128xf32, #tpu.memory_space<vmem>>) attributes {dimension_semantics = [#tpu.dimension_semantics<parallel>], iteration_bounds = array<i64: 2>, scalar_prefetch = 0 : i64, scratch_operands = 1 : i64, tpu.core_type = #tpu.core_type<tc>, window_params = [{transform_indices = @transform_0, window_bounds = array<i64: 1, 18, 64>}, {pipeline_mode = #tpu.pipeline_mode<synchronous>, transform_indices = @transform_1, window_bounds = array<i64: 3, 64, 128>}, {pipeline_mode = #tpu.pipeline_mode<synchronous>, transform_indices = @transform_2, window_bounds = array<i64: 1, 128>}, {pipeline_mode = #tpu.pipeline_mode<synchronous>, transform_indices = @transform_3, window_bounds = array<i64: 3, 128, 256>}, {pipeline_mode = #tpu.pipeline_mode<synchronous>, transform_indices = @transform_4, window_bounds = array<i64: 1, 256>}, {transform_indices = @transform_5, window_bounds = array<i64: 1, 16, 128>}, {transform_indices = @transform_6, window_bounds = array<i64: 1, 16, 256>}]} {
    %cst = arith.constant 0.000000e+00 : f32
    %0 = vector.broadcast %cst : f32 to vector<1x1x128xf32>
    %c0 = arith.constant 0 : index
    %c0_0 = arith.constant 0 : index
    %c0_1 = arith.constant 0 : index
    %1 = vector.load %arg8[%c0, %c0_0, %c0_1] : memref<1x18x128xf32, #tpu.memory_space<vmem>>, vector<1x1x128xf32>
    tpu.vector_store %arg8[%c0, %c0_0, %c0_1], %0 {strides = array<i32>} : memref<1x18x128xf32, #tpu.memory_space<vmem>>, vector<1x1x128xf32>,
    %cst_2 = arith.constant 0.000000e+00 : f32
    %2 = vector.broadcast %cst_2 : f32 to vector<1x1x128xf32>
    %c0_3 = arith.constant 0 : index
    %c17 = arith.constant 17 : index
    %c0_4 = arith.constant 0 : index
    %3 = vector.load %arg8[%c0_3, %c17, %c0_4] : memref<1x18x128xf32, #tpu.memory_space<vmem>>, vector<1x1x128xf32>
    tpu.vector_store %arg8[%c0_3, %c17, %c0_4], %2 {strides = array<i32>} : memref<1x18x128xf32, #tpu.memory_space<vmem>>, vector<1x1x128xf32>,
    %cst_5 = arith.constant 0.000000e+00 : f32
    %4 = vector.broadcast %cst_5 : f32 to vector<16x128xf32>
    %c0_6 = arith.constant 0 : index
    %c0_7 = arith.constant 0 : index
    %c0_8 = arith.constant 0 : index
    %5 = vector.load %arg1[%c0_6, %c0_7, %c0_8] : memref<1x18x64xf32, #tpu.memory_space<vmem>>, vector<1x16x64xf32>
    %6 = vector.shape_cast %5 : vector<1x16x64xf32> to vector<16x64xf32>
    %7 = arith.truncf %6 : vector<16x64xf32> to vector<16x64xbf16>
    %c0_9 = arith.constant 0 : index
    %c0_10 = arith.constant 0 : index
    %c0_11 = arith.constant 0 : index
    %8 = vector.load %arg2[%c0_9, %c0_10, %c0_11] : memref<3x64x128xbf16, #tpu.memory_space<vmem>>, vector<1x64x128xbf16>
    %9 = vector.shape_cast %8 : vector<1x64x128xbf16> to vector<64x128xbf16>
    %cst_12 = arith.constant dense<0.000000e+00> : vector<16x128xf32>
    %10 = tpu.matmul %7, %9, %cst_12 {dimension_numbers = #tpu.dot_dimension_numbers<[1], [0], [0], [1], [0, 0, 1, 1], [], []>} : vector<16x64xbf16>, vector<64x128xbf16>, vector<16x128xf32> -> vector<16x128xf32>
    %11 = arith.addf %4, %10 : vector<16x128xf32>
    %c0_13 = arith.constant 0 : index
    %c1 = arith.constant 1 : index
    %c0_14 = arith.constant 0 : index
    %12 = vector.load %arg1[%c0_13, %c1, %c0_14] : memref<1x18x64xf32, #tpu.memory_space<vmem>>, vector<1x16x64xf32>
    %13 = vector.shape_cast %12 : vector<1x16x64xf32> to vector<16x64xf32>
    %14 = arith.truncf %13 : vector<16x64xf32> to vector<16x64xbf16>
    %c1_15 = arith.constant 1 : index
    %c0_16 = arith.constant 0 : index
    %c0_17 = arith.constant 0 : index
    %15 = vector.load %arg2[%c1_15, %c0_16, %c0_17] : memref<3x64x128xbf16, #tpu.memory_space<vmem>>, vector<1x64x128xbf16>
    %16 = vector.shape_cast %15 : vector<1x64x128xbf16> to vector<64x128xbf16>
    %cst_18 = arith.constant dense<0.000000e+00> : vector<16x128xf32>
    %17 = tpu.matmul %14, %16, %cst_18 {dimension_numbers = #tpu.dot_dimension_numbers<[1], [0], [0], [1], [0, 0, 1, 1], [], []>} : vector<16x64xbf16>, vector<64x128xbf16>, vector<16x128xf32> -> vector<16x128xf32>
    %18 = arith.addf %11, %17 : vector<16x128xf32>
    %c0_19 = arith.constant 0 : index
    %c2 = arith.constant 2 : index
    %c0_20 = arith.constant 0 : index
    %19 = vector.load %arg1[%c0_19, %c2, %c0_20] : memref<1x18x64xf32, #tpu.memory_space<vmem>>, vector<1x16x64xf32>
    %20 = vector.shape_cast %19 : vector<1x16x64xf32> to vector<16x64xf32>
    %21 = arith.truncf %20 : vector<16x64xf32> to vector<16x64xbf16>
    %c2_21 = arith.constant 2 : index
    %c0_22 = arith.constant 0 : index
    %c0_23 = arith.constant 0 : index
    %22 = vector.load %arg2[%c2_21, %c0_22, %c0_23] : memref<3x64x128xbf16, #tpu.memory_space<vmem>>, vector<1x64x128xbf16>
    %23 = vector.shape_cast %22 : vector<1x64x128xbf16> to vector<64x128xbf16>
    %cst_24 = arith.constant dense<0.000000e+00> : vector<16x128xf32>
    %24 = tpu.matmul %21, %23, %cst_24 {dimension_numbers = #tpu.dot_dimension_numbers<[1], [0], [0], [1], [0, 0, 1, 1], [], []>} : vector<16x64xbf16>, vector<64x128xbf16>, vector<16x128xf32> -> vector<16x128xf32>
    %25 = arith.addf %18, %24 : vector<16x128xf32>
    %c0_25 = arith.constant 0 : index
    %c0_26 = arith.constant 0 : index
    %26 = vector.load %arg3[%c0_25, %c0_26] : memref<1x128xf32, #tpu.memory_space<vmem>>, vector<1x128xf32>
    %27 = vector.broadcast %26 : vector<1x128xf32> to vector<16x128xf32>
    %28 = arith.addf %25, %27 : vector<16x128xf32>
    %29 = vector.shape_cast %28 : vector<16x128xf32> to vector<1x16x128xf32>
    %c0_27 = arith.constant 0 : index
    %c0_28 = arith.constant 0 : index
    %c0_29 = arith.constant 0 : index
    %30 = vector.load %arg6[%c0_27, %c0_28, %c0_29] : memref<1x16x128xf32, #tpu.memory_space<vmem>>, vector<1x16x128xf32>
    tpu.vector_store %arg6[%c0_27, %c0_28, %c0_29], %29 {strides = array<i32>} : memref<1x16x128xf32, #tpu.memory_space<vmem>>, vector<1x16x128xf32>,
    %cst_30 = arith.constant 0.000000e+00 : f32
    %31 = vector.broadcast %cst_30 : f32 to vector<16x128xf32>
    %32 = arith.maximumf %28, %31 : vector<16x128xf32>
    %33 = vector.shape_cast %32 : vector<16x128xf32> to vector<1x16x128xf32>
    %c0_31 = arith.constant 0 : index
    %c1_32 = arith.constant 1 : index
    %c0_33 = arith.constant 0 : index
    %34 = vector.load %arg8[%c0_31, %c1_32, %c0_33] : memref<1x18x128xf32, #tpu.memory_space<vmem>>, vector<1x16x128xf32>
    tpu.vector_store %arg8[%c0_31, %c1_32, %c0_33], %33 {strides = array<i32>} : memref<1x18x128xf32, #tpu.memory_space<vmem>>, vector<1x16x128xf32>,
    %cst_34 = arith.constant 0.000000e+00 : f32
    %35 = vector.broadcast %cst_34 : f32 to vector<16x256xf32>
    %c0_35 = arith.constant 0 : index
    %c0_36 = arith.constant 0 : index
    %c0_37 = arith.constant 0 : index
    %36 = vector.load %arg8[%c0_35, %c0_36, %c0_37] : memref<1x18x128xf32, #tpu.memory_space<vmem>>, vector<1x16x128xf32>
    %37 = vector.shape_cast %36 : vector<1x16x128xf32> to vector<16x128xf32>
    %38 = arith.truncf %37 : vector<16x128xf32> to vector<16x128xbf16>
    %c0_38 = arith.constant 0 : index
    %c0_39 = arith.constant 0 : index
    %c0_40 = arith.constant 0 : index
    %39 = vector.load %arg4[%c0_38, %c0_39, %c0_40] : memref<3x128x256xbf16, #tpu.memory_space<vmem>>, vector<1x128x256xbf16>
    %40 = vector.shape_cast %39 : vector<1x128x256xbf16> to vector<128x256xbf16>
    %cst_41 = arith.constant dense<0.000000e+00> : vector<16x256xf32>
    %41 = tpu.matmul %38, %40, %cst_41 {dimension_numbers = #tpu.dot_dimension_numbers<[1], [0], [0], [1], [0, 0, 1, 1], [], []>} : vector<16x128xbf16>, vector<128x256xbf16>, vector<16x256xf32> -> vector<16x256xf32>
    %42 = arith.addf %35, %41 : vector<16x256xf32>
    %c0_42 = arith.constant 0 : index
    %c1_43 = arith.constant 1 : index
    %c0_44 = arith.constant 0 : index
    %43 = vector.load %arg8[%c0_42, %c1_43, %c0_44] : memref<1x18x128xf32, #tpu.memory_space<vmem>>, vector<1x16x128xf32>
    %44 = vector.shape_cast %43 : vector<1x16x128xf32> to vector<16x128xf32>
    %45 = arith.truncf %44 : vector<16x128xf32> to vector<16x128xbf16>
    %c1_45 = arith.constant 1 : index
    %c0_46 = arith.constant 0 : index
    %c0_47 = arith.constant 0 : index
    %46 = vector.load %arg4[%c1_45, %c0_46, %c0_47] : memref<3x128x256xbf16, #tpu.memory_space<vmem>>, vector<1x128x256xbf16>
    %47 = vector.shape_cast %46 : vector<1x128x256xbf16> to vector<128x256xbf16>
    %cst_48 = arith.constant dense<0.000000e+00> : vector<16x256xf32>
    %48 = tpu.matmul %45, %47, %cst_48 {dimension_numbers = #tpu.dot_dimension_numbers<[1], [0], [0], [1], [0, 0, 1, 1], [], []>} : vector<16x128xbf16>, vector<128x256xbf16>, vector<16x256xf32> -> vector<16x256xf32>
    %49 = arith.addf %42, %48 : vector<16x256xf32>
    %c0_49 = arith.constant 0 : index
    %c2_50 = arith.constant 2 : index
    %c0_51 = arith.constant 0 : index
    %50 = vector.load %arg8[%c0_49, %c2_50, %c0_51] : memref<1x18x128xf32, #tpu.memory_space<vmem>>, vector<1x16x128xf32>
    %51 = vector.shape_cast %50 : vector<1x16x128xf32> to vector<16x128xf32>
    %52 = arith.truncf %51 : vector<16x128xf32> to vector<16x128xbf16>
    %c2_52 = arith.constant 2 : index
    %c0_53 = arith.constant 0 : index
    %c0_54 = arith.constant 0 : index
    %53 = vector.load %arg4[%c2_52, %c0_53, %c0_54] : memref<3x128x256xbf16, #tpu.memory_space<vmem>>, vector<1x128x256xbf16>
    %54 = vector.shape_cast %53 : vector<1x128x256xbf16> to vector<128x256xbf16>
    %cst_55 = arith.constant dense<0.000000e+00> : vector<16x256xf32>
    %55 = tpu.matmul %52, %54, %cst_55 {dimension_numbers = #tpu.dot_dimension_numbers<[1], [0], [0], [1], [0, 0, 1, 1], [], []>} : vector<16x128xbf16>, vector<128x256xbf16>, vector<16x256xf32> -> vector<16x256xf32>
    %56 = arith.addf %49, %55 : vector<16x256xf32>
    %c0_56 = arith.constant 0 : index
    %c0_57 = arith.constant 0 : index
    %57 = vector.load %arg5[%c0_56, %c0_57] : memref<1x256xf32, #tpu.memory_space<vmem>>, vector<1x256xf32>
    %58 = vector.broadcast %57 : vector<1x256xf32> to vector<16x256xf32>
    %59 = arith.addf %56, %58 : vector<16x256xf32>
    %60 = vector.shape_cast %59 : vector<16x256xf32> to vector<1x16x256xf32>
    %c0_58 = arith.constant 0 : index
    %c0_59 = arith.constant 0 : index
    %c0_60 = arith.constant 0 : index
    %61 = vector.load %arg7[%c0_58, %c0_59, %c0_60] : memref<1x16x256xf32, #tpu.memory_space<vmem>>, vector<1x16x256xf32>
    tpu.vector_store %arg7[%c0_58, %c0_59, %c0_60], %60 {strides = array<i32>} : memref<1x16x256xf32, #tpu.memory_space<vmem>>, vector<1x16x256xf32>,
    return
  }
  func.func @transform_0(%arg0: i32) -> (i32, i32, i32) {
    %c0_i32 = arith.constant 0 : i32
    %c0_i32_0 = arith.constant 0 : i32
    %c0_i32_1 = arith.constant 0 : i32
    return %arg0, %c0_i32, %c0_i32_0 : i32, i32, i32
  }
  func.func @transform_1(%arg0: i32) -> (i32, i32, i32) {
    %c0_i32 = arith.constant 0 : i32
    %c0_i32_0 = arith.constant 0 : i32
    %c0_i32_1 = arith.constant 0 : i32
    %c0_i32_2 = arith.constant 0 : i32
    return %c0_i32, %c0_i32_0, %c0_i32_1 : i32, i32, i32
  }
  func.func @transform_2(%arg0: i32) -> (i32, i32) {
    %c0_i32 = arith.constant 0 : i32
    %c0_i32_0 = arith.constant 0 : i32
    %c0_i32_1 = arith.constant 0 : i32
    return %c0_i32, %c0_i32_0 : i32, i32
  }
  func.func @transform_3(%arg0: i32) -> (i32, i32, i32) {
    %c0_i32 = arith.constant 0 : i32
    %c0_i32_0 = arith.constant 0 : i32
    %c0_i32_1 = arith.constant 0 : i32
    %c0_i32_2 = arith.constant 0 : i32
    return %c0_i32, %c0_i32_0, %c0_i32_1 : i32, i32, i32
  }
  func.func @transform_4(%arg0: i32) -> (i32, i32) {
    %c0_i32 = arith.constant 0 : i32
    %c0_i32_0 = arith.constant 0 : i32
    %c0_i32_1 = arith.constant 0 : i32
    return %c0_i32, %c0_i32_0 : i32, i32
  }
  func.func @transform_5(%arg0: i32) -> (i32, i32, i32) {
    %c0_i32 = arith.constant 0 : i32
    %c0_i32_0 = arith.constant 0 : i32
    %c0_i32_1 = arith.constant 0 : i32
    return %arg0, %c0_i32, %c0_i32_0 : i32, i32, i32
  }
  func.func @transform_6(%arg0: i32) -> (i32, i32, i32) {
    %c0_i32 = arith.constant 0 : i32
    %c0_i32_0 = arith.constant 0 : i32
    %c0_i32_1 = arith.constant 0 : i32
    return %arg0, %c0_i32, %c0_i32_0 : i32, i32, i32
  }
}

</mosaic_0001>

<llo_original>
// kernel: tpu_custom_call.1
$region0: #{tpu_custom_call.1}
  #allocation0 [shape = 'u32[]', space=smem, size = 0x4, offset = 0x4, fixed_abs, tag = 'smem constant byte address 0x4 - core index']
  #allocation1 [shape = 'u32[72,128]{1,0:T(1,128)}', space=vmem, size = 0x9000, scoped, tag = 'internal scratch']
  #allocation2 [shape = 'f32[1,18,128]{2,1,0:T(8,128)}', space=vmem, size = 0x3000, scoped, tag = 'scratch operand']
  %s0 = inlined_call_operand.vmem [shape: f32[2,18,64], index: 0, kind: input, shape index: {}]
  %s1 = inlined_call_operand.hbm [shape: bf16[3,64,128], index: 1, kind: input, shape index: {}]
  %s2 = inlined_call_operand.vmem [shape: f32[1,128], index: 2, kind: input, shape index: {}]
  %s3 = inlined_call_operand.hbm [shape: bf16[3,128,256], index: 3, kind: input, shape index: {}]
  %s4 = inlined_call_operand.vmem [shape: f32[1,256], index: 4, kind: input, shape index: {}]
  %s5 = inlined_call_operand.hbm [shape: f32[2,16,128], index: 5, kind: output, shape index: {0}]
  %s6 = inlined_call_operand.hbm [shape: f32[2,16,256], index: 6, kind: output, shape index: {1}]
  %7 = xla_tuple %s5, %s6
  %s8 = sld [smem:[#allocation0]]
  $region69: #{tpu_custom_call.1} parent=0
    _
  %s10 = ssub.s32 1, %s8
  %s11 = scalar_select 0, %s10, %s8
  $region1: #{tpu_custom_call.1} parent=0
    #allocation3 [shape = 'u8[49152]{0}', space=vmem, size = 0xc000, scoped, tag = 'input window, operand 1, single buffered']
    #allocation4 [shape = 's32[2]{0}', space=sflag, size = 0x8, scoped, tag = 'scoped memory for tpu_custom_call.1']
    #allocation5 [shape = 's32[2]{0}', space=sflag, size = 0x8, scoped, tag = 'scoped memory for tpu_custom_call.1']
    #allocation6 [shape = 'u8[196608]{0}', space=vmem, size = 0x30000, scoped, tag = 'input window, operand 3, single buffered']
    #allocation7 [shape = 's32[1]{0}', space=sflag, size = 0x4, scoped, tag = 'scoped memory for tpu_custom_call.1']
    #allocation8 [shape = 'u8[16384]{0}', space=vmem, size = 0x4000, scoped, tag = 'output window, operand 0']
    #allocation9 [shape = 'u8[32768]{0}', space=vmem, size = 0x8000, scoped, tag = 'output window, operand 1']
    #allocation10 [shape = 's32[2]{0}', space=sflag, size = 0x8, scoped, tag = 'scoped memory for tpu_custom_call.1']
    %12 = vsyncpa [#allocation4], 0
    %13 = vsyncpa [#allocation7], 0
    %14 = vsyncpa [#allocation5], 0
    %s15 = scalar_lea.sflag [#allocation5], 1
    %16 = vsyncpa %s15, 0
    %17 = vsyncpa [#allocation10], 0
    %s18 = scalar_lea.sflag [#allocation10], 1
    %19 = vsyncpa %s18, 0
    loop: start=0, step=1, limit=4
    $region2: #{tpu_custom_call.1} parent=1 // loop_pre_header
      _
    $region3: #{tpu_custom_call.1} parent=1 // loop_header
      %s21 = sphi 0, %s25
      %p22 = scmp.ge.s32.totalorder %s21, 4
      %s31 = sphi 0, %s33
      %s34 = sphi 0, %s31
      %s35 = sphi 0, %s34
      %s51 = sphi 0, %s35
      %s55 = sphi 0, %s55
      %s57 = sphi 0, %s55
      %s58 = sphi 0, %s57
      %s72 = sphi 0, %s58
      %s76 = sphi 0, %s76
      %s78 = sphi 0, %s76
      %s79 = sphi 0, %s78
      %s93 = sphi 0, %s79
      %s97 = sphi 0, %s97
      %s99 = sphi 0, %s97
      %s100 = sphi 0, %s99
      %s114 = sphi 0, %s100
      %s118 = sphi 0, %s118
      %s120 = sphi 0, %s118
      %s121 = sphi 0, %s120
      %s135 = sphi 0, %s121
      %s141 = sphi 0, %s143
      %s144 = sphi 0, %s141
      %s145 = sphi 0, %s144
      %s161 = sphi 0, %s145
      %s167 = sphi 0, %s169
      %s170 = sphi 0, %s167
      %s171 = sphi 0, %s170
      %s187 = sphi 0, %s171
    $region4: #{tpu_custom_call.1} parent=1 // loop_header_branch
      %24 = sbr.rel (%p22) target = $region8
    $region5: #{tpu_custom_call.1} parent=1 // loop_body
      %s26 = ssub.s32 %s21, 1
      %s27 = ssub.s32 %s21, 2
      %s28 = sadd.s32 %s21, 1
      %s29 = ssub.s32 %s21, %s28
      %p30 = scmp.eq.s32.totalorder %s29, 0
      %s32 = sadd.s32 %s31, 1
      %s33 = scalar_select %p30, %s31, %s32
      %p36 = pneg %p30
      %p37 = scmp.eq.s32.totalorder %s21, 1
      %p38 = por %p36, %p37
      %p39 = scmp.ne.s32.totalorder %s31, %s34
      %p40 = scmp.eq.s32.totalorder %s21, 0
      %p41 = por %p39, %p40
      %p42 = scmp.ne.s32.totalorder %s31, %s34
      %p43 = scmp.eq.s32.totalorder %s26, 1
      %p44 = por %p42, %p43
      %p45 = scmp.ne.s32.totalorder %s34, %s35
      %p46 = scmp.eq.s32.totalorder %s26, 0
      %p47 = por %p45, %p46
      %p48 = scmp.ne.s32.totalorder %s34, %s35
      %p49 = scmp.eq.s32.totalorder %s27, 1
      %p50 = por %p48, %p49
      %p52 = scmp.ne.s32.totalorder %s35, %s51
      %p53 = scmp.eq.s32.totalorder %s27, 0
      %p54 = por %p52, %p53
      %s56 = sadd.s32 %s55, 1
      %p59 = scmp.eq.s32.totalorder %s21, 1
      %p60 = scmp.ne.s32.totalorder %s55, %s57
      %p61 = scmp.eq.s32.totalorder %s21, 0
      %p62 = por %p60, %p61
      %p63 = scmp.ne.s32.totalorder %s55, %s57
      %p64 = scmp.eq.s32.totalorder %s26, 1
      %p65 = por %p63, %p64
      %p66 = scmp.ne.s32.totalorder %s57, %s58
      %p67 = scmp.eq.s32.totalorder %s26, 0
      %p68 = por %p66, %p67
      %p69 = scmp.ne.s32.totalorder %s57, %s58
      %p70 = scmp.eq.s32.totalorder %s27, 1
      %p71 = por %p69, %p70
      %p73 = scmp.ne.s32.totalorder %s58, %s72
      %p74 = scmp.eq.s32.totalorder %s27, 0
      %p75 = por %p73, %p74
      %s77 = sadd.s32 %s76, 1
      %p80 = scmp.eq.s32.totalorder %s21, 1
      %p81 = scmp.ne.s32.totalorder %s76, %s78
      %p82 = scmp.eq.s32.totalorder %s21, 0
      %p83 = por %p81, %p82
      %p84 = scmp.ne.s32.totalorder %s76, %s78
      %p85 = scmp.eq.s32.totalorder %s26, 1
      %p86 = por %p84, %p85
      %p87 = scmp.ne.s32.totalorder %s78, %s79
      %p88 = scmp.eq.s32.totalorder %s26, 0
      %p89 = por %p87, %p88
      %p90 = scmp.ne.s32.totalorder %s78, %s79
      %p91 = scmp.eq.s32.totalorder %s27, 1
      %p92 = por %p90, %p91
      %p94 = scmp.ne.s32.totalorder %s79, %s93
      %p95 = scmp.eq.s32.totalorder %s27, 0
      %p96 = por %p94, %p95
      %s98 = sadd.s32 %s97, 1
      %p101 = scmp.eq.s32.totalorder %s21, 1
      %p102 = scmp.ne.s32.totalorder %s97, %s99
      %p103 = scmp.eq.s32.totalorder %s21, 0
      %p104 = por %p102, %p103
      %p105 = scmp.ne.s32.totalorder %s97, %s99
      %p106 = scmp.eq.s32.totalorder %s26, 1
      %p107 = por %p105, %p106
      %p108 = scmp.ne.s32.totalorder %s99, %s100
      %p109 = scmp.eq.s32.totalorder %s26, 0
      %p110 = por %p108, %p109
      %p111 = scmp.ne.s32.totalorder %s99, %s100
      %p112 = scmp.eq.s32.totalorder %s27, 1
      %p113 = por %p111, %p112
      %p115 = scmp.ne.s32.totalorder %s100, %s114
      %p116 = scmp.eq.s32.totalorder %s27, 0
      %p117 = por %p115, %p116
      %s119 = sadd.s32 %s118, 1
      %p122 = scmp.eq.s32.totalorder %s21, 1
      %p123 = scmp.ne.s32.totalorder %s118, %s120
      %p124 = scmp.eq.s32.totalorder %s21, 0
      %p125 = por %p123, %p124
      %p126 = scmp.ne.s32.totalorder %s118, %s120
      %p127 = scmp.eq.s32.totalorder %s26, 1
      %p128 = por %p126, %p127
      %p129 = scmp.ne.s32.totalorder %s120, %s121
      %p130 = scmp.eq.s32.totalorder %s26, 0
      %p131 = por %p129, %p130
      %p132 = scmp.ne.s32.totalorder %s120, %s121
      %p133 = scmp.eq.s32.totalorder %s27, 1
      %p134 = por %p132, %p133
      %p136 = scmp.ne.s32.totalorder %s121, %s135
      %p137 = scmp.eq.s32.totalorder %s27, 0
      %p138 = por %p136, %p137
      %s139 = ssub.s32 %s21, %s28
      %p140 = scmp.eq.s32.totalorder %s139, 0
      %s142 = sadd.s32 %s141, 1
      %s143 = scalar_select %p140, %s141, %s142
      %p146 = pneg %p140
      %p147 = scmp.eq.s32.totalorder %s21, 1
      %p148 = por %p146, %p147
      %p149 = scmp.ne.s32.totalorder %s141, %s144
      %p150 = scmp.eq.s32.totalorder %s21, 0
      %p151 = por %p149, %p150
      %p152 = scmp.ne.s32.totalorder %s141, %s144
      %p153 = scmp.eq.s32.totalorder %s26, 1
      %p154 = por %p152, %p153
      %p155 = scmp.ne.s32.totalorder %s144, %s145
      %p156 = scmp.eq.s32.totalorder %s26, 0
      %p157 = por %p155, %p156
      %p158 = scmp.ne.s32.totalorder %s144, %s145
      %p159 = scmp.eq.s32.totalorder %s27, 1
      %p160 = por %p158, %p159
      %p162 = scmp.ne.s32.totalorder %s145, %s161
      %p163 = scmp.eq.s32.totalorder %s27, 0
      %p164 = por %p162, %p163
      %s165 = ssub.s32 %s21, %s28
      %p166 = scmp.eq.s32.totalorder %s165, 0
      %s168 = sadd.s32 %s167, 1
      %s169 = scalar_select %p166, %s167, %s168
      %p172 = pneg %p166
      %p173 = scmp.eq.s32.totalorder %s21, 1
      %p174 = por %p172, %p173
      %p175 = scmp.ne.s32.totalorder %s167, %s170
      %p176 = scmp.eq.s32.totalorder %s21, 0
      %p177 = por %p175, %p176
      %p178 = scmp.ne.s32.totalorder %s167, %s170
      %p179 = scmp.eq.s32.totalorder %s26, 1
      %p180 = por %p178, %p179
      %p181 = scmp.ne.s32.totalorder %s170, %s171
      %p182 = scmp.eq.s32.totalorder %s26, 0
      %p183 = por %p181, %p182
      %p184 = scmp.ne.s32.totalorder %s170, %s171
      %p185 = scmp.eq.s32.totalorder %s27, 1
      %p186 = por %p184, %p185
      %p188 = scmp.ne.s32.totalorder %s171, %s187
      %p189 = scmp.eq.s32.totalorder %s27, 0
      %p190 = por %p188, %p189
      %p191 = scmp.le.s32.totalorder 1, %s21
      %p192 = scmp.lt.s32.totalorder %s21, 3
      %p193 = pnand %p191, %p192
      %p194 = pneg %p193
      // Predicated region
      $region9: #{tpu_custom_call.1} parent=5 // pred_check
        _
      $region10: #{tpu_custom_call.1} parent=5 // pred_check_branch
        %196 = sbr.rel (%p193) target = $region12
      $region11: #{tpu_custom_call.1} parent=5 // pred_region
        %s197 = ssub.s32 %s21, 1
        // Predicated region
        $region13: #{tpu_custom_call.1} parent=11 // pred_check
          %p198 = pneg %p68
        $region14: #{tpu_custom_call.1} parent=11 // pred_check_branch
          %200 = sbr.rel (%p198) target = $region16
        $region15: #{tpu_custom_call.1} parent=11 // pred_region
          %202 = vsyncadd [#allocation4], 0
          %s203 = sshll.u32 %s1, 4
          %s204 = int_to_ptr.hbm [resolvable:$true] %s203
          %s205 = sshll.u32 [#allocation3], 4
          %s206 = int_to_ptr.vmem [resolvable:$true] %s205
          %211 = dma.hbm_to_vmem [thread:$0]  %s204, 1536, %s206, [#allocation4], 64, 64, 4
        $region16: #{tpu_custom_call.1} parent=11 // pred_fallthru
          _
        // Predicated region
        $region17: #{tpu_custom_call.1} parent=11 // pred_check
          %p212 = pneg %p89
        $region18: #{tpu_custom_call.1} parent=11 // pred_check_branch
          %214 = sbr.rel (%p212) target = $region20
        $region19: #{tpu_custom_call.1} parent=11 // pred_region
          _
        $region20: #{tpu_custom_call.1} parent=11 // pred_fallthru
          _
        // Predicated region
        $region21: #{tpu_custom_call.1} parent=11 // pred_check
          %p215 = pneg %p110
        $region22: #{tpu_custom_call.1} parent=11 // pred_check_branch
          %217 = sbr.rel (%p215) target = $region24
        $region23: #{tpu_custom_call.1} parent=11 // pred_region
          %219 = vsyncadd [#allocation7], 0
          %s220 = sshll.u32 %s3, 4
          %s221 = int_to_ptr.hbm [resolvable:$true] %s220
          %s222 = sshll.u32 [#allocation6], 4
          %s223 = int_to_ptr.vmem [resolvable:$true] %s222
          %228 = dma.hbm_to_vmem [thread:$0]  %s221, 6144, %s223, [#allocation7], 128, 128, 8
        $region24: #{tpu_custom_call.1} parent=11 // pred_fallthru
          _
        // Predicated region
        $region25: #{tpu_custom_call.1} parent=11 // pred_check
          %p229 = pneg %p131
        $region26: #{tpu_custom_call.1} parent=11 // pred_check_branch
          %231 = sbr.rel (%p229) target = $region28
        $region27: #{tpu_custom_call.1} parent=11 // pred_region
          _
        $region28: #{tpu_custom_call.1} parent=11 // pred_fallthru
          _
      $region12: #{tpu_custom_call.1} parent=5 // pred_fallthru
        _
      %p232 = scmp.lt.s32.totalorder %s21, 2
      // Predicated region
      $region29: #{tpu_custom_call.1} parent=5 // pred_check
        %p233 = pneg %p232
      $region30: #{tpu_custom_call.1} parent=5 // pred_check_branch
        %235 = sbr.rel (%p233) target = $region32
      $region31: #{tpu_custom_call.1} parent=5 // pred_region
        // Predicated region
        $region33: #{tpu_custom_call.1} parent=31 // pred_check
          %p236 = pneg %p41
        $region34: #{tpu_custom_call.1} parent=31 // pred_check_branch
          %238 = sbr.rel (%p236) target = $region36
        $region35: #{tpu_custom_call.1} parent=31 // pred_region
          %p239 = scmp.lt.s32.totalorder %s21, 1
          %s240 = scalar_select %p239, %s21, 1
          %s241 = smul.addr %s240, 3
          %s242 = smul.addr %s241, 8
          %s243 = scalar_lea.vmem %s0, %s242
        $region36: #{tpu_custom_call.1} parent=31 // pred_fallthru
          _
      $region32: #{tpu_custom_call.1} parent=5 // pred_fallthru
        _
      %p244 = scmp.le.s32.totalorder 1, %s21
      %p245 = scmp.lt.s32.totalorder %s21, 3
      %p246 = pnand %p244, %p245
      %p247 = pneg %p246
      // Predicated region
      $region37: #{tpu_custom_call.1} parent=5 // pred_check
        _
      $region38: #{tpu_custom_call.1} parent=5 // pred_check_branch
        %249 = sbr.rel (%p246) target = $region40
      $region39: #{tpu_custom_call.1} parent=5 // pred_region
        %s250 = ssub.s32 %s21, 1
        // Predicated region
        $region41: #{tpu_custom_call.1} parent=39 // pred_check
          %p251 = pneg %p68
        $region42: #{tpu_custom_call.1} parent=39 // pred_check_branch
          %253 = sbr.rel (%p251) target = $region44
        $region43: #{tpu_custom_call.1} parent=39 // pred_region
          %255 = dma.done [#allocation4], 1536
        $region44: #{tpu_custom_call.1} parent=39 // pred_fallthru
          _
        // Predicated region
        $region45: #{tpu_custom_call.1} parent=39 // pred_check
          %p256 = pneg %p110
        $region46: #{tpu_custom_call.1} parent=39 // pred_check_branch
          %258 = sbr.rel (%p256) target = $region48
        $region47: #{tpu_custom_call.1} parent=39 // pred_region
          %260 = dma.done [#allocation7], 6144
        $region48: #{tpu_custom_call.1} parent=39 // pred_fallthru
          _
        %p261 = scmp.lt.s32.totalorder %s26, 1
        %s262 = scalar_select %p261, %s26, 1
        %s263 = smul.addr %s262, 3
        %s264 = smul.addr %s263, 8
        %s265 = scalar_lea.vmem %s0, %s264
        %p266 = pneg %p47
        %p267 = pneg %p44
        %p268 = pneg %p68
        %p269 = pneg %p65
        %p270 = pneg %p89
        %p271 = pneg %p86
        %p272 = pneg %p110
        %p273 = pneg %p107
        %p274 = pneg %p131
        %p275 = pneg %p128
        %p276 = pneg %p157
        %p277 = pneg %p154
        %s278 = sand.u32 %s144, 1
        %s279 = scalar_lea.sflag [#allocation5], %s278
        %s280 = sand.u32 %s144, 1
        %s281 = smul.addr %s280, 16
        %s282 = scalar_lea.vmem [#allocation8], %s281
        %p283 = pneg %p183
        %p284 = pneg %p180
        %s285 = sand.u32 %s170, 1
        %s286 = scalar_lea.sflag [#allocation10], %s285
        %s287 = sand.u32 %s170, 1
        %s288 = smul.addr %s287, 32
        %s289 = scalar_lea.vmem [#allocation9], %s288
        %p290 = scmp.lt.s32.totalorder %s26, 1
        %s291 = scalar_select %p290, %s26, 1
        %s292 = smul.addr %s291, 3
        %s293 = smul.addr %s292, 8
        %s294 = scalar_lea.vmem %s0, %s293
        %296 = vst [vmem:[#allocation2] sm:$0x1] 0.0
        %297 = vst [vmem:[#allocation2 + $0x11] sm:$0x1] 0.0
        %v298 = vld [vmem:[%s294] sm:$0xff]
        %v299 = vld [vmem:[%s294 + $0x8] sm:$0xff]
        %v300 = vpack.c.bf16 %v299, %v298
        %v301 = vld [vmem:[#allocation3] sm:$0xf]
        %v302 = vld [vmem:[#allocation3 + $0x4] sm:$0xf]
        %v303 = vld [vmem:[#allocation3 + $0x8] sm:$0xf]
        %v304 = vld [vmem:[#allocation3 + $0xc] sm:$0xf]
        %v305 = vld [vmem:[#allocation3 + $0x10] sm:$0xf]
        %v306 = vld [vmem:[#allocation3 + $0x14] sm:$0xf]
        %v307 = vld [vmem:[#allocation3 + $0x18] sm:$0xf]
        %v308 = vld [vmem:[#allocation3 + $0x1c] sm:$0xf]
        %v309 = vld [vmem:[%s294 + $0x1] sm:$0xff]
        %v310 = vld [vmem:[%s294 + $0x9] sm:$0xff]
        %v311 = vpack.c.bf16 %v310, %v309
        %s312 = scalar_lea.vmem [#allocation3], 32
        %v313 = vld [vmem:[%s312] sm:$0xf]
        %v314 = vld [vmem:[%s312 + $0x4] sm:$0xf]
        %v315 = vld [vmem:[%s312 + $0x8] sm:$0xf]
        %v316 = vld [vmem:[%s312 + $0xc] sm:$0xf]
        %v317 = vld [vmem:[%s312 + $0x10] sm:$0xf]
        %v318 = vld [vmem:[%s312 + $0x14] sm:$0xf]
        %v319 = vld [vmem:[%s312 + $0x18] sm:$0xf]
        %v320 = vld [vmem:[%s312 + $0x1c] sm:$0xf]
        %v329 = vunpack.c.l.b16 %v313
        %v330 = vunpack.c.l.b16 %v314
        %v331 = vunpack.c.l.b16 %v315
        %v332 = vunpack.c.l.b16 %v316
        %v333 = vunpack.c.l.b16 %v317
        %v334 = vunpack.c.l.b16 %v318
        %v335 = vunpack.c.l.b16 %v319
        %v336 = vunpack.c.l.b16 %v320
        %v337 = vpack.c.b16 %v330, %v329
        %v338 = vpack.c.b16 %v332, %v331
        %v339 = vpack.c.b16 %v334, %v333
        %v340 = vpack.c.b16 %v336, %v335
        %vm345 = vcmask 523264
        %v347 = vsel %vm345, %v311, 0
        %349 = vmatpush.bf16.msra.mxu0 0
        %350 = vmatpush.bf16.msra.mxu0 0
        %351 = vmatpush.bf16.msra.mxu0 0
        %352 = vmatpush.bf16.msra.mxu0 0
        %353 = vmatpush.bf16.msra.mxu0 %v340
        %354 = vmatpush.bf16.msra.mxu0 %v339
        %355 = vmatpush.bf16.msra.mxu0 %v338
        %356 = vmatpush.bf16.msra.mxu0 %v337
        %357 = vmatmul.bf16.gmra.mxu0 %v347
        %v358 = vpop.f32.mrf.mxu0
        %v359 = vadd.f32 0.0, %v358
        %v360 = vpop.f32.mrf.mxu0
        %v361 = vadd.f32 0.0, %v360
        %362 = vdwg.mxu0
        %v371 = vunpack.c.l.b16 %v301
        %v372 = vunpack.c.l.b16 %v302
        %v373 = vunpack.c.l.b16 %v303
        %v374 = vunpack.c.l.b16 %v304
        %v375 = vunpack.c.l.b16 %v305
        %v376 = vunpack.c.l.b16 %v306
        %v377 = vunpack.c.l.b16 %v307
        %v378 = vunpack.c.l.b16 %v308
        %v379 = vpack.c.b16 %v372, %v371
        %v380 = vpack.c.b16 %v374, %v373
        %v381 = vpack.c.b16 %v376, %v375
        %v382 = vpack.c.b16 %v378, %v377
        %v388 = vsel %vm345, %v300, 0
        %390 = vmatpush.bf16.msra.mxu0 0
        %391 = vmatpush.bf16.msra.mxu0 0
        %392 = vmatpush.bf16.msra.mxu0 0
        %393 = vmatpush.bf16.msra.mxu0 0
        %394 = vmatpush.bf16.msra.mxu0 %v382
        %395 = vmatpush.bf16.msra.mxu0 %v381
        %396 = vmatpush.bf16.msra.mxu0 %v380
        %397 = vmatpush.bf16.msra.mxu0 %v379
        %398 = vmatmul.bf16.gmra.mxu0 %v388
        %v399 = vpop.f32.mrf.mxu0
        %v400 = vadd.f32 %v359, %v399
        %v401 = vpop.f32.mrf.mxu0
        %v402 = vadd.f32 %v361, %v401
        %403 = vdwg.mxu0
        %v404 = vld [vmem:[%s294 + $0x2] sm:$0xff]
        %v405 = vld [vmem:[%s294 + $0xa] sm:$0xff]
        %v406 = vpack.c.bf16 %v405, %v404
        %s407 = scalar_lea.vmem [#allocation3], 64
        %v408 = vld [vmem:[%s407] sm:$0xf]
        %v409 = vld [vmem:[%s407 + $0x4] sm:$0xf]
        %v410 = vld [vmem:[%s407 + $0x8] sm:$0xf]
        %v411 = vld [vmem:[%s407 + $0xc] sm:$0xf]
        %v412 = vld [vmem:[%s407 + $0x10] sm:$0xf]
        %v413 = vld [vmem:[%s407 + $0x14] sm:$0xf]
        %v414 = vld [vmem:[%s407 + $0x18] sm:$0xf]
        %v415 = vld [vmem:[%s407 + $0x1c] sm:$0xf]
        %v424 = vunpack.c.l.b16 %v408
        %v425 = vunpack.c.l.b16 %v409
        %v426 = vunpack.c.l.b16 %v410
        %v427 = vunpack.c.l.b16 %v411
        %v428 = vunpack.c.l.b16 %v412
        %v429 = vunpack.c.l.b16 %v413
        %v430 = vunpack.c.l.b16 %v414
        %v431 = vunpack.c.l.b16 %v415
        %v432 = vpack.c.b16 %v425, %v424
        %v433 = vpack.c.b16 %v427, %v426
        %v434 = vpack.c.b16 %v429, %v428
        %v435 = vpack.c.b16 %v431, %v430
        %v441 = vsel %vm345, %v406, 0
        %443 = vmatpush.bf16.msra.mxu0 0
        %444 = vmatpush.bf16.msra.mxu0 0
        %445 = vmatpush.bf16.msra.mxu0 0
        %446 = vmatpush.bf16.msra.mxu0 0
        %447 = vmatpush.bf16.msra.mxu0 %v435
        %448 = vmatpush.bf16.msra.mxu0 %v434
        %449 = vmatpush.bf16.msra.mxu0 %v433
        %450 = vmatpush.bf16.msra.mxu0 %v432
        %451 = vmatmul.bf16.gmra.mxu0 %v441
        %v452 = vpop.f32.mrf.mxu0
        %v453 = vadd.f32 0.0, %v452
        %v454 = vpop.f32.mrf.mxu0
        %v455 = vadd.f32 0.0, %v454
        %456 = vdwg.mxu0
        %v457 = vadd.f32 %v400, %v453
        %v458 = vadd.f32 %v402, %v455
        %v459 = vld [vmem:[%s2] sm:$0x1]
        %v461 = vperm.slane %v459, 0
        %v463 = vadd.f32 %v457, %v461
        %v464 = vadd.f32 %v458, %v461
        %465 = vst [vmem:[%s282] sm:$0xff] %v463
        %466 = vst [vmem:[%s282 + $0x8] sm:$0xff] %v464
        %v467 = vmax.f32 %v463, 0.0
        %v468 = vmax.f32 %v464, 0.0
        %469 = vst [vmem:[#allocation2 + $0x1] sm:$0xff] %v467
        %470 = vst [vmem:[#allocation2 + $0x9] sm:$0xff] %v468
        %v471 = vld [vmem:[#allocation2] sm:$0xff]
        %v472 = vld [vmem:[#allocation2 + $0x8] sm:$0xff]
        %v473 = vpack.c.bf16 %v472, %v471
        %v474 = vld [vmem:[#allocation6] sm:$0xff]
        %v475 = vld [vmem:[#allocation6 + $0x8] sm:$0xff]
        %v476 = vld [vmem:[#allocation6 + $0x10] sm:$0xff]
        %v477 = vld [vmem:[#allocation6 + $0x18] sm:$0xff]
        %v478 = vld [vmem:[#allocation6 + $0x20] sm:$0xff]
        %v479 = vld [vmem:[#allocation6 + $0x28] sm:$0xff]
        %v480 = vld [vmem:[#allocation6 + $0x30] sm:$0xff]
        %v481 = vld [vmem:[#allocation6 + $0x38] sm:$0xff]
        %v482 = vld [vmem:[#allocation6 + $0x40] sm:$0xff]
        %v483 = vld [vmem:[#allocation6 + $0x48] sm:$0xff]
        %v484 = vld [vmem:[#allocation6 + $0x50] sm:$0xff]
        %v485 = vld [vmem:[#allocation6 + $0x58] sm:$0xff]
        %v486 = vld [vmem:[#allocation6 + $0x60] sm:$0xff]
        %v487 = vld [vmem:[#allocation6 + $0x68] sm:$0xff]
        %v488 = vld [vmem:[#allocation6 + $0x70] sm:$0xff]
        %v489 = vld [vmem:[#allocation6 + $0x78] sm:$0xff]
        %v490 = vld [vmem:[#allocation2 + $0x1] sm:$0xff]
        %v491 = vld [vmem:[#allocation2 + $0x9] sm:$0xff]
        %v492 = vpack.c.bf16 %v491, %v490
        %s493 = scalar_lea.vmem [#allocation6], 128
        %v494 = vld [vmem:[%s493] sm:$0xff]
        %v495 = vld [vmem:[%s493 + $0x8] sm:$0xff]
        %v496 = vld [vmem:[%s493 + $0x10] sm:$0xff]
        %v497 = vld [vmem:[%s493 + $0x18] sm:$0xff]
        %v498 = vld [vmem:[%s493 + $0x20] sm:$0xff]
        %v499 = vld [vmem:[%s493 + $0x28] sm:$0xff]
        %v500 = vld [vmem:[%s493 + $0x30] sm:$0xff]
        %v501 = vld [vmem:[%s493 + $0x38] sm:$0xff]
        %v502 = vld [vmem:[%s493 + $0x40] sm:$0xff]
        %v503 = vld [vmem:[%s493 + $0x48] sm:$0xff]
        %v504 = vld [vmem:[%s493 + $0x50] sm:$0xff]
        %v505 = vld [vmem:[%s493 + $0x58] sm:$0xff]
        %v506 = vld [vmem:[%s493 + $0x60] sm:$0xff]
        %v507 = vld [vmem:[%s493 + $0x68] sm:$0xff]
        %v508 = vld [vmem:[%s493 + $0x70] sm:$0xff]
        %v509 = vld [vmem:[%s493 + $0x78] sm:$0xff]
        %v526 = vunpack.c.l.b16 %v494
        %v527 = vunpack.c.h.b16 %v494
        %v528 = vunpack.c.l.b16 %v495
        %v529 = vunpack.c.h.b16 %v495
        %v530 = vunpack.c.l.b16 %v496
        %v531 = vunpack.c.h.b16 %v496
        %v532 = vunpack.c.l.b16 %v497
        %v533 = vunpack.c.h.b16 %v497
        %v534 = vunpack.c.l.b16 %v498
        %v535 = vunpack.c.h.b16 %v498
        %v536 = vunpack.c.l.b16 %v499
        %v537 = vunpack.c.h.b16 %v499
        %v538 = vunpack.c.l.b16 %v500
        %v539 = vunpack.c.h.b16 %v500
        %v540 = vunpack.c.l.b16 %v501
        %v541 = vunpack.c.h.b16 %v501
        %v542 = vunpack.c.l.b16 %v502
        %v543 = vunpack.c.h.b16 %v502
        %v544 = vunpack.c.l.b16 %v503
        %v545 = vunpack.c.h.b16 %v503
        %v546 = vunpack.c.l.b16 %v504
        %v547 = vunpack.c.h.b16 %v504
        %v548 = vunpack.c.l.b16 %v505
        %v549 = vunpack.c.h.b16 %v505
        %v550 = vunpack.c.l.b16 %v506
        %v551 = vunpack.c.h.b16 %v506
        %v552 = vunpack.c.l.b16 %v507
        %v553 = vunpack.c.h.b16 %v507
        %v554 = vunpack.c.l.b16 %v508
        %v555 = vunpack.c.h.b16 %v508
        %v556 = vunpack.c.l.b16 %v509
        %v557 = vunpack.c.h.b16 %v509
        %v558 = vpack.c.b16 %v528, %v526
        %v559 = vpack.c.b16 %v529, %v527
        %v560 = vpack.c.b16 %v532, %v530
        %v561 = vpack.c.b16 %v533, %v531
        %v562 = vpack.c.b16 %v536, %v534
        %v563 = vpack.c.b16 %v537, %v535
        %v564 = vpack.c.b16 %v540, %v538
        %v565 = vpack.c.b16 %v541, %v539
        %v566 = vpack.c.b16 %v544, %v542
        %v567 = vpack.c.b16 %v545, %v543
        %v568 = vpack.c.b16 %v548, %v546
        %v569 = vpack.c.b16 %v549, %v547
        %v570 = vpack.c.b16 %v552, %v550
        %v571 = vpack.c.b16 %v553, %v551
        %v572 = vpack.c.b16 %v556, %v554
        %v573 = vpack.c.b16 %v557, %v555
        %590 = vmatpush.bf16.msra.mxu0 %v572
        %591 = vmatpush.bf16.msra.mxu0 %v570
        %592 = vmatpush.bf16.msra.mxu0 %v568
        %593 = vmatpush.bf16.msra.mxu0 %v566
        %594 = vmatpush.bf16.msra.mxu0 %v564
        %595 = vmatpush.bf16.msra.mxu0 %v562
        %596 = vmatpush.bf16.msra.mxu0 %v560
        %597 = vmatpush.bf16.msra.mxu0 %v558
        %598 = vmatmul.bf16.gmra.mxu0 %v492
        %v599 = vpop.f32.mrf.mxu0
        %v600 = vadd.f32 0.0, %v599
        %v601 = vpop.f32.mrf.mxu0
        %v602 = vadd.f32 0.0, %v601
        %603 = vdwg.mxu0
        %604 = vmatpush.bf16.msra.mxu0 %v573
        %605 = vmatpush.bf16.msra.mxu0 %v571
        %606 = vmatpush.bf16.msra.mxu0 %v569
        %607 = vmatpush.bf16.msra.mxu0 %v567
        %608 = vmatpush.bf16.msra.mxu0 %v565
        %609 = vmatpush.bf16.msra.mxu0 %v563
        %610 = vmatpush.bf16.msra.mxu0 %v561
        %611 = vmatpush.bf16.msra.mxu0 %v559
        %612 = vmatmul.bf16.gmra.mxu0 %v492
        %v613 = vpop.f32.mrf.mxu0
        %v614 = vadd.f32 0.0, %v613
        %v615 = vpop.f32.mrf.mxu0
        %v616 = vadd.f32 0.0, %v615
        %617 = vdwg.mxu0
        %v634 = vunpack.c.l.b16 %v474
        %v635 = vunpack.c.h.b16 %v474
        %v636 = vunpack.c.l.b16 %v475
        %v637 = vunpack.c.h.b16 %v475
        %v638 = vunpack.c.l.b16 %v476
        %v639 = vunpack.c.h.b16 %v476
        %v640 = vunpack.c.l.b16 %v477
        %v641 = vunpack.c.h.b16 %v477
        %v642 = vunpack.c.l.b16 %v478
        %v643 = vunpack.c.h.b16 %v478
        %v644 = vunpack.c.l.b16 %v479
        %v645 = vunpack.c.h.b16 %v479
        %v646 = vunpack.c.l.b16 %v480
        %v647 = vunpack.c.h.b16 %v480
        %v648 = vunpack.c.l.b16 %v481
        %v649 = vunpack.c.h.b16 %v481
        %v650 = vunpack.c.l.b16 %v482
        %v651 = vunpack.c.h.b16 %v482
        %v652 = vunpack.c.l.b16 %v483
        %v653 = vunpack.c.h.b16 %v483
        %v654 = vunpack.c.l.b16 %v484
        %v655 = vunpack.c.h.b16 %v484
        %v656 = vunpack.c.l.b16 %v485
        %v657 = vunpack.c.h.b16 %v485
        %v658 = vunpack.c.l.b16 %v486
        %v659 = vunpack.c.h.b16 %v486
        %v660 = vunpack.c.l.b16 %v487
        %v661 = vunpack.c.h.b16 %v487
        %v662 = vunpack.c.l.b16 %v488
        %v663 = vunpack.c.h.b16 %v488
        %v664 = vunpack.c.l.b16 %v489
        %v665 = vunpack.c.h.b16 %v489
        %v666 = vpack.c.b16 %v636, %v634
        %v667 = vpack.c.b16 %v637, %v635
        %v668 = vpack.c.b16 %v640, %v638
        %v669 = vpack.c.b16 %v641, %v639
        %v670 = vpack.c.b16 %v644, %v642
        %v671 = vpack.c.b16 %v645, %v643
        %v672 = vpack.c.b16 %v648, %v646
        %v673 = vpack.c.b16 %v649, %v647
        %v674 = vpack.c.b16 %v652, %v650
        %v675 = vpack.c.b16 %v653, %v651
        %v676 = vpack.c.b16 %v656, %v654
        %v677 = vpack.c.b16 %v657, %v655
        %v678 = vpack.c.b16 %v660, %v658
        %v679 = vpack.c.b16 %v661, %v659
        %v680 = vpack.c.b16 %v664, %v662
        %v681 = vpack.c.b16 %v665, %v663
        %698 = vmatpush.bf16.msra.mxu0 %v680
        %699 = vmatpush.bf16.msra.mxu0 %v678
        %700 = vmatpush.bf16.msra.mxu0 %v676
        %701 = vmatpush.bf16.msra.mxu0 %v674
        %702 = vmatpush.bf16.msra.mxu0 %v672
        %703 = vmatpush.bf16.msra.mxu0 %v670
        %704 = vmatpush.bf16.msra.mxu0 %v668
        %705 = vmatpush.bf16.msra.mxu0 %v666
        %706 = vmatmul.bf16.gmra.mxu0 %v473
        %v707 = vpop.f32.mrf.mxu0
        %v708 = vadd.f32 %v600, %v707
        %v709 = vpop.f32.mrf.mxu0
        %v710 = vadd.f32 %v602, %v709
        %711 = vdwg.mxu0
        %712 = vmatpush.bf16.msra.mxu0 %v681
        %713 = vmatpush.bf16.msra.mxu0 %v679
        %714 = vmatpush.bf16.msra.mxu0 %v677
        %715 = vmatpush.bf16.msra.mxu0 %v675
        %716 = vmatpush.bf16.msra.mxu0 %v673
        %717 = vmatpush.bf16.msra.mxu0 %v671
        %718 = vmatpush.bf16.msra.mxu0 %v669
        %719 = vmatpush.bf16.msra.mxu0 %v667
        %720 = vmatmul.bf16.gmra.mxu0 %v473
        %v721 = vpop.f32.mrf.mxu0
        %v722 = vadd.f32 %v614, %v721
        %v723 = vpop.f32.mrf.mxu0
        %v724 = vadd.f32 %v616, %v723
        %725 = vdwg.mxu0
        %v726 = vld [vmem:[#allocation2 + $0x2] sm:$0xff]
        %v727 = vld [vmem:[#allocation2 + $0xa] sm:$0xff]
        %v728 = vpack.c.bf16 %v727, %v726
        %s729 = scalar_lea.vmem [#allocation6], 256
        %v730 = vld [vmem:[%s729] sm:$0xff]
        %v731 = vld [vmem:[%s729 + $0x8] sm:$0xff]
        %v732 = vld [vmem:[%s729 + $0x10] sm:$0xff]
        %v733 = vld [vmem:[%s729 + $0x18] sm:$0xff]
        %v734 = vld [vmem:[%s729 + $0x20] sm:$0xff]
        %v735 = vld [vmem:[%s729 + $0x28] sm:$0xff]
        %v736 = vld [vmem:[%s729 + $0x30] sm:$0xff]
        %v737 = vld [vmem:[%s729 + $0x38] sm:$0xff]
        %v738 = vld [vmem:[%s729 + $0x40] sm:$0xff]
        %v739 = vld [vmem:[%s729 + $0x48] sm:$0xff]
        %v740 = vld [vmem:[%s729 + $0x50] sm:$0xff]
        %v741 = vld [vmem:[%s729 + $0x58] sm:$0xff]
        %v742 = vld [vmem:[%s729 + $0x60] sm:$0xff]
        %v743 = vld [vmem:[%s729 + $0x68] sm:$0xff]
        %v744 = vld [vmem:[%s729 + $0x70] sm:$0xff]
        %v745 = vld [vmem:[%s729 + $0x78] sm:$0xff]
        %v762 = vunpack.c.l.b16 %v730
        %v763 = vunpack.c.h.b16 %v730
        %v764 = vunpack.c.l.b16 %v731
        %v765 = vunpack.c.h.b16 %v731
        %v766 = vunpack.c.l.b16 %v732
        %v767 = vunpack.c.h.b16 %v732
        %v768 = vunpack.c.l.b16 %v733
        %v769 = vunpack.c.h.b16 %v733
        %v770 = vunpack.c.l.b16 %v734
        %v771 = vunpack.c.h.b16 %v734
        %v772 = vunpack.c.l.b16 %v735
        %v773 = vunpack.c.h.b16 %v735
        %v774 = vunpack.c.l.b16 %v736
        %v775 = vunpack.c.h.b16 %v736
        %v776 = vunpack.c.l.b16 %v737
        %v777 = vunpack.c.h.b16 %v737
        %v778 = vunpack.c.l.b16 %v738
        %v779 = vunpack.c.h.b16 %v738
        %v780 = vunpack.c.l.b16 %v739
        %v781 = vunpack.c.h.b16 %v739
        %v782 = vunpack.c.l.b16 %v740
        %v783 = vunpack.c.h.b16 %v740
        %v784 = vunpack.c.l.b16 %v741
        %v785 = vunpack.c.h.b16 %v741
        %v786 = vunpack.c.l.b16 %v742
        %v787 = vunpack.c.h.b16 %v742
        %v788 = vunpack.c.l.b16 %v743
        %v789 = vunpack.c.h.b16 %v743
        %v790 = vunpack.c.l.b16 %v744
        %v791 = vunpack.c.h.b16 %v744
        %v792 = vunpack.c.l.b16 %v745
        %v793 = vunpack.c.h.b16 %v745
        %v794 = vpack.c.b16 %v764, %v762
        %v795 = vpack.c.b16 %v765, %v763
        %v796 = vpack.c.b16 %v768, %v766
        %v797 = vpack.c.b16 %v769, %v767
        %v798 = vpack.c.b16 %v772, %v770
        %v799 = vpack.c.b16 %v773, %v771
        %v800 = vpack.c.b16 %v776, %v774
        %v801 = vpack.c.b16 %v777, %v775
        %v802 = vpack.c.b16 %v780, %v778
        %v803 = vpack.c.b16 %v781, %v779
        %v804 = vpack.c.b16 %v784, %v782
        %v805 = vpack.c.b16 %v785, %v783
        %v806 = vpack.c.b16 %v788, %v786
        %v807 = vpack.c.b16 %v789, %v787
        %v808 = vpack.c.b16 %v792, %v790
        %v809 = vpack.c.b16 %v793, %v791
        %826 = vmatpush.bf16.msra.mxu0 %v808
        %827 = vmatpush.bf16.msra.mxu0 %v806
        %828 = vmatpush.bf16.msra.mxu0 %v804
        %829 = vmatpush.bf16.msra.mxu0 %v802
        %830 = vmatpush.bf16.msra.mxu0 %v800
        %831 = vmatpush.bf16.msra.mxu0 %v798
        %832 = vmatpush.bf16.msra.mxu0 %v796
        %833 = vmatpush.bf16.msra.mxu0 %v794
        %834 = vmatmul.bf16.gmra.mxu0 %v728
        %v835 = vpop.f32.mrf.mxu0
        %v836 = vadd.f32 0.0, %v835
        %v837 = vpop.f32.mrf.mxu0
        %v838 = vadd.f32 0.0, %v837
        %839 = vdwg.mxu0
        %840 = vmatpush.bf16.msra.mxu0 %v809
        %841 = vmatpush.bf16.msra.mxu0 %v807
        %842 = vmatpush.bf16.msra.mxu0 %v805
        %843 = vmatpush.bf16.msra.mxu0 %v803
        %844 = vmatpush.bf16.msra.mxu0 %v801
        %845 = vmatpush.bf16.msra.mxu0 %v799
        %846 = vmatpush.bf16.msra.mxu0 %v797
        %847 = vmatpush.bf16.msra.mxu0 %v795
        %848 = vmatmul.bf16.gmra.mxu0 %v728
        %v849 = vpop.f32.mrf.mxu0
        %v850 = vadd.f32 0.0, %v849
        %v851 = vpop.f32.mrf.mxu0
        %v852 = vadd.f32 0.0, %v851
        %853 = vdwg.mxu0
        %v854 = vadd.f32 %v708, %v836
        %v855 = vadd.f32 %v722, %v850
        %v856 = vadd.f32 %v710, %v838
        %v857 = vadd.f32 %v724, %v852
        %v858 = vld [vmem:[%s4] sm:$0x3]
        %v860 = vperm.slane %v858, 0
        %v861 = vperm.slane %v858, 1
        %v864 = vadd.f32 %v854, %v860
        %v865 = vadd.f32 %v855, %v861
        %v866 = vadd.f32 %v856, %v860
        %v867 = vadd.f32 %v857, %v861
        %868 = vst [vmem:[%s289] sm:$0xff] %v864
        %869 = vst [vmem:[%s289 + $0x8] sm:$0xff] %v865
        %870 = vst [vmem:[%s289 + $0x10] sm:$0xff] %v866
        %871 = vst [vmem:[%s289 + $0x18] sm:$0xff] %v867
        %s872 = sand.u32 %s144, 1
        %s873 = scalar_lea.sflag [#allocation5], %s872
        %s874 = sand.u32 %s144, 1
        %s875 = smul.addr %s874, 16
        %s876 = scalar_lea.vmem [#allocation8], %s875
        %s877 = sand.u32 %s170, 1
        %s878 = scalar_lea.sflag [#allocation10], %s877
        %s879 = sand.u32 %s170, 1
        %s880 = smul.addr %s879, 32
        %s881 = scalar_lea.vmem [#allocation9], %s880
        // Predicated region
        $region49: #{tpu_custom_call.1} parent=39 // pred_check
          %p882 = pneg %p154
        $region50: #{tpu_custom_call.1} parent=39 // pred_check_branch
          %884 = sbr.rel (%p882) target = $region52
        $region51: #{tpu_custom_call.1} parent=39 // pred_region
          %886 = vsyncadd %s873, 0
          %s887 = smul.addr %s26, 2
          %s888 = smul.addr %s887, 8
          %s889 = scalar_lea.hbm %s5, %s888
          %s890 = sshll.u32 %s876, 4
          %s891 = int_to_ptr.vmem [resolvable:$true] %s890
          %s892 = sshll.u32 %s889, 4
          %s893 = int_to_ptr.hbm [resolvable:$true] %s892
          %898 = dma.vmem_to_hbm [thread:$0]  %s891, 256, %s893, %s873, 128, 128, 8
        $region52: #{tpu_custom_call.1} parent=39 // pred_fallthru
          _
        // Predicated region
        $region53: #{tpu_custom_call.1} parent=39 // pred_check
          %p899 = pneg %p180
        $region54: #{tpu_custom_call.1} parent=39 // pred_check_branch
          %901 = sbr.rel (%p899) target = $region56
        $region55: #{tpu_custom_call.1} parent=39 // pred_region
          %903 = vsyncadd %s878, 0
          %s904 = smul.addr %s26, 4
          %s905 = smul.addr %s904, 8
          %s906 = scalar_lea.hbm %s6, %s905
          %s907 = sshll.u32 %s881, 4
          %s908 = int_to_ptr.vmem [resolvable:$true] %s907
          %s909 = sshll.u32 %s906, 4
          %s910 = int_to_ptr.hbm [resolvable:$true] %s909
          %915 = dma.vmem_to_hbm [thread:$0]  %s908, 512, %s910, %s878, 256, 256, 16
        $region56: #{tpu_custom_call.1} parent=39 // pred_fallthru
          _
      $region40: #{tpu_custom_call.1} parent=5 // pred_fallthru
        _
      %p916 = scmp.le.s32.totalorder 2, %s21
      // Predicated region
      $region57: #{tpu_custom_call.1} parent=5 // pred_check
        %p917 = pneg %p916
      $region58: #{tpu_custom_call.1} parent=5 // pred_check_branch
        %919 = sbr.rel (%p917) target = $region60
      $region59: #{tpu_custom_call.1} parent=5 // pred_region
        %s920 = ssub.s32 %s21, 2
        // Predicated region
        $region61: #{tpu_custom_call.1} parent=59 // pred_check
          %p921 = pneg %p160
        $region62: #{tpu_custom_call.1} parent=59 // pred_check_branch
          %923 = sbr.rel (%p921) target = $region64
        $region63: #{tpu_custom_call.1} parent=59 // pred_region
          %s924 = sand.u32 %s145, 1
          %s925 = scalar_lea.sflag [#allocation5], %s924
          %s926 = sand.u32 %s145, 1
          %s927 = smul.addr %s926, 16
          %s928 = scalar_lea.vmem [#allocation8], %s927
          %930 = dma.done %s925, 256
        $region64: #{tpu_custom_call.1} parent=59 // pred_fallthru
          _
        // Predicated region
        $region65: #{tpu_custom_call.1} parent=59 // pred_check
          %p931 = pneg %p186
        $region66: #{tpu_custom_call.1} parent=59 // pred_check_branch
          %933 = sbr.rel (%p931) target = $region68
        $region67: #{tpu_custom_call.1} parent=59 // pred_region
          %s934 = sand.u32 %s171, 1
          %s935 = scalar_lea.sflag [#allocation10], %s934
          %s936 = sand.u32 %s171, 1
          %s937 = smul.addr %s936, 32
          %s938 = scalar_lea.vmem [#allocation9], %s937
          %940 = dma.done %s935, 512
        $region68: #{tpu_custom_call.1} parent=59 // pred_fallthru
          _
      $region60: #{tpu_custom_call.1} parent=5 // pred_fallthru
        _
    $region6: #{tpu_custom_call.1} parent=1 // loop_footer
      %s25 = sadd.s32 1, %s21
    $region7: #{tpu_custom_call.1} parent=1 // loop_footer_branch
      %20 = sbr.rel target = $region3
    $region8: #{tpu_custom_call.1} parent=1 // loop_exit
      _
    %941 = vsyncpa [#allocation4], 1
    %s942 = scalar_lea.sflag [#allocation4], 1
    %943 = vsyncpa %s942, 1
    %944 = vsyncpa [#allocation7], 1
    %945 = vsyncpa [#allocation5], 1
    %s946 = scalar_lea.sflag [#allocation5], 1
    %947 = vsyncpa %s946, 1
    %948 = vsyncpa [#allocation10], 1
    %s949 = scalar_lea.sflag [#allocation10], 1
    %950 = vsyncpa %s949, 1

</llo_original>
